<compile_context>
chip_gen: v5e
topology: v5e:2x2
jax: 0.10.0
libtpu: 0.0.40
codegen_flags: <defaults>
</compile_context>

<pallas_src>
import functools

import jax
import jax.numpy as jnp
import numpy as np
from jax.experimental import pallas as pl
from jax.experimental.pallas import tpu as pltpu


# ----------------------------------------------------------------------------- kernel


def _fc4_kernel(x_ref, h_ref, w1_ref, wa1_ref, wih_ref, whh_ref, wa2_ref,
                w2h_ref, w2a_ref, b1_ref, ba1_ref, bih_ref, bhh_ref, ba2_ref,
                b2_ref, q_ref, h_out_ref, *, A, F, lid, atto, hd):
    f32 = jnp.float32
    X = x_ref[...]                       # (BB, A*F)   agent-major feature lanes
    H = h_ref[...]                       # (BB, A*hd)  agent-major hidden lanes

    # fc1 / att1 (block-diagonal over agents; the `mat` lanes hit zero weight rows)
    x_g = jnp.maximum(
        jnp.dot(X, w1_ref[...], preferred_element_type=f32) + b1_ref[...], 0.0)
    a1_g = jnp.maximum(
        jnp.dot(X, wa1_ref[...], preferred_element_type=f32) + ba1_ref[...], 0.0)

    # GRUCell, gate-major packing: columns = [ r | z | n ], each A*hd wide (128-aligned).
    gi = jnp.dot(x_g, wih_ref[...], preferred_element_type=f32) + bih_ref[...]
    gh = jnp.dot(H, whh_ref[...], preferred_element_type=f32) + bhh_ref[...]
    G = A * hd
    r = jax.nn.sigmoid(gi[:, :G] + gh[:, :G])
    z = jax.nn.sigmoid(gi[:, G:2 * G] + gh[:, G:2 * G])
    n = jnp.tanh(gi[:, 2 * G:] + r * gh[:, 2 * G:])
    h_new = (1.0 - z) * n + z * H                                   # (BB, A*hd)

    # attention second layer
    att = jnp.maximum(
        jnp.dot(a1_g, wa2_ref[...], preferred_element_type=f32) + ba2_ref[...], 0.0)

    # per-batch bmm: att_vec[:, i*atto:(i+1)*atto] = sum_j mat[b,i,j] * att[:, j*atto:...]
    # coefficients mat[b,i,j] live at lane i*F + lid + j of X -> pure 2-D VPU mul-adds.
    pieces = []
    for i in range(A):
        acc = None
        for j in range(A):
            c = X[:, i * F + lid + j:i * F + lid + j + 1]           # (BB, 1)
            t = c * att[:, j * atto:(j + 1) * atto]                 # (BB, atto)
            acc = t if acc is None else acc + t
        pieces.append(acc)
    att_vec = jnp.concatenate(pieces, axis=-1)                      # (BB, A*atto)

    # fc2: split matmuls (no activation concatenation)
    q = (jnp.dot(h_new, w2h_ref[...], preferred_element_type=f32)
         + jnp.dot(att_vec, w2a_ref[...], preferred_element_type=f32)
         + b2_ref[...])                                             # (BB, A*n_actions)

    q_ref[...] = q
    h_out_ref[...] = h_new


# ---------------------------------------------------------------------- parameter packing


def _block_diag(w, A):
    w = np.asarray(w, np.float32)
    K, N = w.shape
    out = np.zeros((A * K, A * N), np.float32)
    for a in range(A):
        out[a * K:(a + 1) * K, a * N:(a + 1) * N] = w
    return out


def _tile_bias(b, A):
    return np.tile(np.asarray(b, np.float32), (1, A))


def pack_params(p, A):
    """Expand per-layer weights into block-diagonal / agent-tiled form.

    Runs ONCE at init time (not inside the jitted forward).  Column layouts:
      * fc1/att1/att2/fc2: agent-major blocks.
      * GRU: gate-major [ r | z | n ], each segment agent-major (A*hd wide).
    Rows of fc1/att1 cover the full per-agent feature block (lid self-features + A mat
    columns), with the mat rows left zero -- adding exact zeros keeps numerics identical.
    """
    lid, lod = p["w_fc1"].shape
    atto = p["w_att1"].shape[1]
    hd = p["w_hh"].shape[0]
    F = lid + A

    def sv_block(w):                      # (lid, N) -> (A*F, A*N), mat rows zero
        w = np.asarray(w, np.float32)
        N = w.shape[1]
        out = np.zeros((A * F, A * N), np.float32)
        for a in range(A):
            out[a * F:a * F + lid, a * N:(a + 1) * N] = w
        return out

    def gate_major_w(w):                  # (K, 3*hd) -> (A*K, 3*A*hd), [r|z|n]
        return np.concatenate(
            [_block_diag(np.asarray(w)[:, g * hd:(g + 1) * hd], A) for g in range(3)],
            axis=1)

    def gate_major_b(b):
        return np.concatenate(
            [_tile_bias(np.asarray(b)[:, g * hd:(g + 1) * hd], A) for g in range(3)],
            axis=1)

    packed = {
        "w1": sv_block(p["w_fc1"]),        "b1": _tile_bias(p["b_fc1"], A),
        "wa1": sv_block(p["w_att1"]),      "ba1": _tile_bias(p["b_att1"], A),
        "wih": gate_major_w(p["w_ih"]),    "bih": gate_major_b(p["b_ih"]),
        "whh": gate_major_w(p["w_hh"]),    "bhh": gate_major_b(p["b_hh"]),
        "wa2": _block_diag(p["w_att2"], A), "ba2": _tile_bias(p["b_att2"], A),
        "w2h": _block_diag(p["w_fc2h"], A),
        "w2a": _block_diag(p["w_fc2a"], A),
        "b2": _tile_bias(p["b_fc2"], A),
    }
    return {k: jnp.asarray(v) for k, v in packed.items()}


_WEIGHT_NAMES = ("w1", "wa1", "wih", "whh", "wa2", "w2h", "w2a",
                 "b1", "ba1", "bih", "bhh", "ba2", "b2")


# ----------------------------------------------------------------------------- wrapper


def _choose_block_batch(B, target=1024, min_split=512):
    """Batch rows per grid step.

    Targets ~1024 sublane rows per step (amortizes the ~0.35us/step overhead), keeps the
    block a multiple of 8 sublanes (unless it is the whole batch), caps per-step VMEM well
    under the v7x 64 MiB budget, and uses an even number of >= min_split-row steps when the
    batch is large enough so both v7x TensorCores get work.  Non-dividing B is handled by a
    cdiv grid with a masked tail block.
    """
    steps = -(-B // target)
    if steps == 1 and B >= 2 * min_split:
        steps = 2
    if steps > 1 and steps % 2 == 1:
        steps += 1
    bb = -(-B // steps)
    bb = -(-bb // 8) * 8
    if bb >= B:
        return B
    return bb


@jax.jit
def fc4_forward(inputs, hidden, packed):
    """inputs: (B, A, lid + A), hidden: (B, A, hd), packed: dict from pack_params."""
    B, A, Ftot = inputs.shape
    lid = Ftot - A
    hd = hidden.shape[-1]
    atto = packed["wa2"].shape[1] // A
    na = packed["b2"].shape[1] // A

    # Free, contiguous reshapes (no HBM copies): agent-major lane layout.
    X = inputs.reshape(B, A * Ftot)
    H = hidden.reshape(B, A * hd)

    BB = _choose_block_batch(B)
    grid = (pl.cdiv(B, BB),)

    kernel = functools.partial(_fc4_kernel, A=A, F=Ftot, lid=lid, atto=atto, hd=hd)
    weights = [packed[k] for k in _WEIGHT_NAMES]

    def row_spec(width):
        return pl.BlockSpec((BB, width), lambda i: (i, 0))

    def full_spec(arr):
        return pl.BlockSpec(arr.shape, lambda i: (0, 0))   # constant block -> DMA'd once

    q_g, h_g = pl.pallas_call(
        kernel,
        grid=grid,
        in_specs=[row_spec(A * Ftot), row_spec(A * hd)] + [full_spec(w) for w in weights],
        out_specs=(row_spec(A * na), row_spec(A * hd)),
        out_shape=(jax.ShapeDtypeStruct((B, A * na), jnp.float32),
                   jax.ShapeDtypeStruct((B, A * hd), jnp.float32)),
        compiler_params=pltpu.CompilerParams(
            dimension_semantics=("parallel",),
            vmem_limit_bytes=32 * 1024 * 1024),
    )(X, H, *weights)

    return q_g.reshape(B, A, na), h_g.reshape(B, A, hd)


# ---------------------------------------------------------------------- reference & init


def fc4_reference(inputs, hidden, p):
    """Pure-JAX reference reproducing the PyTorch FC4 forward."""
    B, A, Ftot = inputs.shape
    lid = Ftot - A
    sv = inputs[:, :, :lid]
    mat = inputs[:, :, lid:]
    Hd = hidden.shape[-1]

    x = jax.nn.relu(sv @ p["w_fc1"] + p["b_fc1"])
    gi = x @ p["w_ih"] + p["b_ih"]
    gh = hidden @ p["w_hh"] + p["b_hh"]
    r = jax.nn.sigmoid(gi[..., :Hd] + gh[..., :Hd])
    z = jax.nn.sigmoid(gi[..., Hd:2 * Hd] + gh[..., Hd:2 * Hd])
    n = jnp.tanh(gi[..., 2 * Hd:] + r * gh[..., 2 * Hd:])
    h_new = (1.0 - z) * n + z * hidden

    a1 = jax.nn.relu(sv @ p["w_att1"] + p["b_att1"])
    att = jax.nn.relu(a1 @ p["w_att2"] + p["b_att2"])
    att_vec = jnp.einsum("bij,bjk->bik", mat, att)

    q = h_new @ p["w_fc2h"] + att_vec @ p["w_fc2a"] + p["b_fc2"]
    return q, h_new


def init_params(key, lid, n_actions, lod=16, atto=32, hd=32):
    ks = jax.random.split(key, 16)
    w = lambda k, shape: (0.1 * jax.random.normal(k, shape)).astype(jnp.float32)
    return {
        "w_fc1": w(ks[0], (lid, lod)),   "b_fc1": w(ks[1], (1, lod)),
        # GRUCell weights kept in transposed (in, 3*hd) column-stacked [r | z | n] layout.
        "w_ih": w(ks[2], (lod, 3 * hd)), "b_ih": w(ks[3], (1, 3 * hd)),
        "w_hh": w(ks[4], (hd, 3 * hd)),  "b_hh": w(ks[5], (1, 3 * hd)),
        "w_att1": w(ks[6], (lid, atto)), "b_att1": w(ks[7], (1, atto)),
        "w_att2": w(ks[8], (atto, atto)), "b_att2": w(ks[9], (1, atto)),
        "w_fc2h": w(ks[10], (hd, n_actions)),
        "w_fc2a": w(ks[11], (atto, n_actions)),
        "b_fc2": w(ks[12], (1, n_actions)),
    }


# -------------------------------------------------------------------------------- main


if __name__ == "__main__":
    lod, atto, hd, n_actions = 16, 32, 32, 5

    def run_case(B, A, lid, keys):
        k_in, k_h, k_p = keys
        inputs = jax.random.normal(k_in, (B, A, lid + A), dtype=jnp.float32)
        hidden = jax.random.normal(k_h, (B, A, hd), dtype=jnp.float32)
        params = init_params(k_p, lid, n_actions, lod=lod, atto=atto, hd=hd)
        packed = pack_params(params, A)              # packed once, outside the forward

        q, h_new = jax.block_until_ready(fc4_forward(inputs, hidden, packed))
        q_ref, h_ref = fc4_reference(inputs, hidden, params)
        np.testing.assert_allclose(np.asarray(q), np.asarray(q_ref), rtol=1e-4, atol=1e-4)
        np.testing.assert_allclose(np.asarray(h_new), np.asarray(h_ref), rtol=1e-4, atol=1e-4)

    key = jax.random.PRNGKey(0)
    ks = jax.random.split(key, 6)
    run_case(2, 4, 8, ks[:3])        # small smoke test (single grid step)
    run_case(1037, 4, 8, ks[3:])     # multi-step grid with an uneven (masked) tail block
    print("KERNEL_OK")
</pallas_src>

<mosaic_0001>
module attributes {stable_mosaic.version = 11 : i64} {
  func.func @_fc4_kernel(%arg0: i32, %arg1: memref<2x48xf32, #tpu.memory_space<vmem>>, %arg2: memref<2x128xf32, #tpu.memory_space<vmem>>, %arg3: memref<48x64xf32, #tpu.memory_space<vmem>>, %arg4: memref<48x128xf32, #tpu.memory_space<vmem>>, %arg5: memref<64x384xf32, #tpu.memory_space<vmem>>, %arg6: memref<128x384xf32, #tpu.memory_space<vmem>>, %arg7: memref<128x128xf32, #tpu.memory_space<vmem>>, %arg8: memref<128x20xf32, #tpu.memory_space<vmem>>, %arg9: memref<128x20xf32, #tpu.memory_space<vmem>>, %arg10: memref<1x64xf32, #tpu.memory_space<vmem>>, %arg11: memref<1x128xf32, #tpu.memory_space<vmem>>, %arg12: memref<1x384xf32, #tpu.memory_space<vmem>>, %arg13: memref<1x384xf32, #tpu.memory_space<vmem>>, %arg14: memref<1x128xf32, #tpu.memory_space<vmem>>, %arg15: memref<1x20xf32, #tpu.memory_space<vmem>>, %arg16: memref<2x20xf32, #tpu.memory_space<vmem>>, %arg17: memref<2x128xf32, #tpu.memory_space<vmem>>) attributes {dimension_semantics = [#tpu.dimension_semantics<parallel>], iteration_bounds = array<i64: 1>, scalar_prefetch = 0 : i64, scratch_operands = 0 : i64, tpu.core_type = #tpu.core_type<tc>, window_params = [{transform_indices = @transform_0, window_bounds = array<i64: 2, 48>}, {transform_indices = @transform_1, window_bounds = array<i64: 2, 128>}, {pipeline_mode = #tpu.pipeline_mode<synchronous>, transform_indices = @transform_2, window_bounds = array<i64: 48, 64>}, {pipeline_mode = #tpu.pipeline_mode<synchronous>, transform_indices = @transform_3, window_bounds = array<i64: 48, 128>}, {pipeline_mode = #tpu.pipeline_mode<synchronous>, transform_indices = @transform_4, window_bounds = array<i64: 64, 384>}, {pipeline_mode = #tpu.pipeline_mode<synchronous>, transform_indices = @transform_5, window_bounds = array<i64: 128, 384>}, {pipeline_mode = #tpu.pipeline_mode<synchronous>, transform_indices = @transform_6, window_bounds = array<i64: 128, 128>}, {pipeline_mode = #tpu.pipeline_mode<synchronous>, transform_indices = @transform_7, window_bounds = array<i64: 128, 20>}, {pipeline_mode = #tpu.pipeline_mode<synchronous>, transform_indices = @transform_8, window_bounds = array<i64: 128, 20>}, {pipeline_mode = #tpu.pipeline_mode<synchronous>, transform_indices = @transform_9, window_bounds = array<i64: 1, 64>}, {pipeline_mode = #tpu.pipeline_mode<synchronous>, transform_indices = @transform_10, window_bounds = array<i64: 1, 128>}, {pipeline_mode = #tpu.pipeline_mode<synchronous>, transform_indices = @transform_11, window_bounds = array<i64: 1, 384>}, {pipeline_mode = #tpu.pipeline_mode<synchronous>, transform_indices = @transform_12, window_bounds = array<i64: 1, 384>}, {pipeline_mode = #tpu.pipeline_mode<synchronous>, transform_indices = @transform_13, window_bounds = array<i64: 1, 128>}, {pipeline_mode = #tpu.pipeline_mode<synchronous>, transform_indices = @transform_14, window_bounds = array<i64: 1, 20>}, {transform_indices = @transform_15, window_bounds = array<i64: 2, 20>}, {transform_indices = @transform_16, window_bounds = array<i64: 2, 128>}]} {
    %c0 = arith.constant 0 : index
    %c0_0 = arith.constant 0 : index
    %0 = vector.load %arg1[%c0, %c0_0] : memref<2x48xf32, #tpu.memory_space<vmem>>, vector<2x48xf32>
    %c0_1 = arith.constant 0 : index
    %c0_2 = arith.constant 0 : index
    %1 = vector.load %arg2[%c0_1, %c0_2] : memref<2x128xf32, #tpu.memory_space<vmem>>, vector<2x128xf32>
    %c0_3 = arith.constant 0 : index
    %c0_4 = arith.constant 0 : index
    %2 = vector.load %arg3[%c0_3, %c0_4] : memref<48x64xf32, #tpu.memory_space<vmem>>, vector<48x64xf32>
    %cst = arith.constant dense<0.000000e+00> : vector<2x64xf32>
    %3 = tpu.matmul %0, %2, %cst {dimension_numbers = #tpu.dot_dimension_numbers<[1], [0], [0], [1], [0, 0, 1, 1], [], []>} : vector<2x48xf32>, vector<48x64xf32>, vector<2x64xf32> -> vector<2x64xf32>
    %c0_5 = arith.constant 0 : index
    %c0_6 = arith.constant 0 : index
    %4 = vector.load %arg10[%c0_5, %c0_6] : memref<1x64xf32, #tpu.memory_space<vmem>>, vector<1x64xf32>
    %5 = vector.broadcast %4 : vector<1x64xf32> to vector<2x64xf32>
    %6 = arith.addf %3, %5 : vector<2x64xf32>
    %cst_7 = arith.constant 0.000000e+00 : f32
    %7 = vector.broadcast %cst_7 : f32 to vector<2x64xf32>
    %8 = arith.maximumf %6, %7 : vector<2x64xf32>
    %c0_8 = arith.constant 0 : index
    %c0_9 = arith.constant 0 : index
    %9 = vector.load %arg4[%c0_8, %c0_9] : memref<48x128xf32, #tpu.memory_space<vmem>>, vector<48x128xf32>
    %cst_10 = arith.constant dense<0.000000e+00> : vector<2x128xf32>
    %10 = tpu.matmul %0, %9, %cst_10 {dimension_numbers = #tpu.dot_dimension_numbers<[1], [0], [0], [1], [0, 0, 1, 1], [], []>} : vector<2x48xf32>, vector<48x128xf32>, vector<2x128xf32> -> vector<2x128xf32>
    %c0_11 = arith.constant 0 : index
    %c0_12 = arith.constant 0 : index
    %11 = vector.load %arg11[%c0_11, %c0_12] : memref<1x128xf32, #tpu.memory_space<vmem>>, vector<1x128xf32>
    %12 = vector.broadcast %11 : vector<1x128xf32> to vector<2x128xf32>
    %13 = arith.addf %10, %12 : vector<2x128xf32>
    %cst_13 = arith.constant 0.000000e+00 : f32
    %14 = vector.broadcast %cst_13 : f32 to vector<2x128xf32>
    %15 = arith.maximumf %13, %14 : vector<2x128xf32>
    %c0_14 = arith.constant 0 : index
    %c0_15 = arith.constant 0 : index
    %16 = vector.load %arg5[%c0_14, %c0_15] : memref<64x384xf32, #tpu.memory_space<vmem>>, vector<64x384xf32>
    %cst_16 = arith.constant dense<0.000000e+00> : vector<2x384xf32>
    %17 = tpu.matmul %8, %16, %cst_16 {dimension_numbers = #tpu.dot_dimension_numbers<[1], [0], [0], [1], [0, 0, 1, 1], [], []>} : vector<2x64xf32>, vector<64x384xf32>, vector<2x384xf32> -> vector<2x384xf32>
    %c0_17 = arith.constant 0 : index
    %c0_18 = arith.constant 0 : index
    %18 = vector.load %arg12[%c0_17, %c0_18] : memref<1x384xf32, #tpu.memory_space<vmem>>, vector<1x384xf32>
    %19 = vector.broadcast %18 : vector<1x384xf32> to vector<2x384xf32>
    %20 = arith.addf %17, %19 : vector<2x384xf32>
    %c0_19 = arith.constant 0 : index
    %c0_20 = arith.constant 0 : index
    %21 = vector.load %arg6[%c0_19, %c0_20] : memref<128x384xf32, #tpu.memory_space<vmem>>, vector<128x384xf32>
    %cst_21 = arith.constant dense<0.000000e+00> : vector<2x384xf32>
    %22 = tpu.matmul %1, %21, %cst_21 {dimension_numbers = #tpu.dot_dimension_numbers<[1], [0], [0], [1], [0, 0, 1, 1], [], []>} : vector<2x128xf32>, vector<128x384xf32>, vector<2x384xf32> -> vector<2x384xf32>
    %c0_22 = arith.constant 0 : index
    %c0_23 = arith.constant 0 : index
    %23 = vector.load %arg13[%c0_22, %c0_23] : memref<1x384xf32, #tpu.memory_space<vmem>>, vector<1x384xf32>
    %24 = vector.broadcast %23 : vector<1x384xf32> to vector<2x384xf32>
    %25 = arith.addf %22, %24 : vector<2x384xf32>
    %26 = vector.extract_strided_slice %20 {offsets = [0, 0], sizes = [2, 128], strides = [1, 1]} : vector<2x384xf32> to vector<2x128xf32>
    %27 = vector.extract_strided_slice %25 {offsets = [0, 0], sizes = [2, 128], strides = [1, 1]} : vector<2x384xf32> to vector<2x128xf32>
    %28 = arith.addf %26, %27 : vector<2x128xf32>
    %29 = arith.negf %28 : vector<2x128xf32>
    %30 = math.exp %29 : vector<2x128xf32>
    %cst_24 = arith.constant 1.000000e+00 : f32
    %31 = vector.broadcast %cst_24 : f32 to vector<2x128xf32>
    %32 = arith.addf %31, %30 : vector<2x128xf32>
    %33 = arith.divf %31, %32 : vector<2x128xf32>
    %34 = vector.extract_strided_slice %20 {offsets = [0, 128], sizes = [2, 128], strides = [1, 1]} : vector<2x384xf32> to vector<2x128xf32>
    %35 = vector.extract_strided_slice %25 {offsets = [0, 128], sizes = [2, 128], strides = [1, 1]} : vector<2x384xf32> to vector<2x128xf32>
    %36 = arith.addf %34, %35 : vector<2x128xf32>
    %37 = arith.negf %36 : vector<2x128xf32>
    %38 = math.exp %37 : vector<2x128xf32>
    %cst_25 = arith.constant 1.000000e+00 : f32
    %39 = vector.broadcast %cst_25 : f32 to vector<2x128xf32>
    %40 = arith.addf %39, %38 : vector<2x128xf32>
    %41 = arith.divf %39, %40 : vector<2x128xf32>
    %42 = vector.extract_strided_slice %20 {offsets = [0, 256], sizes = [2, 128], strides = [1, 1]} : vector<2x384xf32> to vector<2x128xf32>
    %43 = vector.extract_strided_slice %25 {offsets = [0, 256], sizes = [2, 128], strides = [1, 1]} : vector<2x384xf32> to vector<2x128xf32>
    %44 = arith.mulf %33, %43 : vector<2x128xf32>
    %45 = arith.addf %42, %44 : vector<2x128xf32>
    %46 = math.tanh %45 : vector<2x128xf32>
    %cst_26 = arith.constant 1.000000e+00 : f32
    %47 = vector.broadcast %cst_26 : f32 to vector<2x128xf32>
    %48 = arith.subf %47, %41 : vector<2x128xf32>
    %49 = arith.mulf %48, %46 : vector<2x128xf32>
    %50 = arith.mulf %41, %1 : vector<2x128xf32>
    %51 = arith.addf %49, %50 : vector<2x128xf32>
    %c0_27 = arith.constant 0 : index
    %c0_28 = arith.constant 0 : index
    %52 = vector.load %arg7[%c0_27, %c0_28] : memref<128x128xf32, #tpu.memory_space<vmem>>, vector<128x128xf32>
    %cst_29 = arith.constant dense<0.000000e+00> : vector<2x128xf32>
    %53 = tpu.matmul %15, %52, %cst_29 {dimension_numbers = #tpu.dot_dimension_numbers<[1], [0], [0], [1], [0, 0, 1, 1], [], []>} : vector<2x128xf32>, vector<128x128xf32>, vector<2x128xf32> -> vector<2x128xf32>
    %c0_30 = arith.constant 0 : index
    %c0_31 = arith.constant 0 : index
    %54 = vector.load %arg14[%c0_30, %c0_31] : memref<1x128xf32, #tpu.memory_space<vmem>>, vector<1x128xf32>
    %55 = vector.broadcast %54 : vector<1x128xf32> to vector<2x128xf32>
    %56 = arith.addf %53, %55 : vector<2x128xf32>
    %cst_32 = arith.constant 0.000000e+00 : f32
    %57 = vector.broadcast %cst_32 : f32 to vector<2x128xf32>
    %58 = arith.maximumf %56, %57 : vector<2x128xf32>
    %59 = vector.extract_strided_slice %0 {offsets = [0, 8], sizes = [2, 1], strides = [1, 1]} : vector<2x48xf32> to vector<2x1xf32>
    %60 = vector.extract_strided_slice %58 {offsets = [0, 0], sizes = [2, 32], strides = [1, 1]} : vector<2x128xf32> to vector<2x32xf32>
    %61 = vector.broadcast %59 : vector<2x1xf32> to vector<2x32xf32>
    %62 = arith.mulf %61, %60 : vector<2x32xf32>
    %63 = vector.extract_strided_slice %0 {offsets = [0, 9], sizes = [2, 1], strides = [1, 1]} : vector<2x48xf32> to vector<2x1xf32>
    %64 = vector.extract_strided_slice %58 {offsets = [0, 32], sizes = [2, 32], strides = [1, 1]} : vector<2x128xf32> to vector<2x32xf32>
    %65 = vector.broadcast %63 : vector<2x1xf32> to vector<2x32xf32>
    %66 = arith.mulf %65, %64 : vector<2x32xf32>
    %67 = arith.addf %62, %66 : vector<2x32xf32>
    %68 = vector.extract_strided_slice %0 {offsets = [0, 10], sizes = [2, 1], strides = [1, 1]} : vector<2x48xf32> to vector<2x1xf32>
    %69 = vector.extract_strided_slice %58 {offsets = [0, 64], sizes = [2, 32], strides = [1, 1]} : vector<2x128xf32> to vector<2x32xf32>
    %70 = vector.broadcast %68 : vector<2x1xf32> to vector<2x32xf32>
    %71 = arith.mulf %70, %69 : vector<2x32xf32>
    %72 = arith.addf %67, %71 : vector<2x32xf32>
    %73 = vector.extract_strided_slice %0 {offsets = [0, 11], sizes = [2, 1], strides = [1, 1]} : vector<2x48xf32> to vector<2x1xf32>
    %74 = vector.extract_strided_slice %58 {offsets = [0, 96], sizes = [2, 32], strides = [1, 1]} : vector<2x128xf32> to vector<2x32xf32>
    %75 = vector.broadcast %73 : vector<2x1xf32> to vector<2x32xf32>
    %76 = arith.mulf %75, %74 : vector<2x32xf32>
    %77 = arith.addf %72, %76 : vector<2x32xf32>
    %78 = vector.extract_strided_slice %0 {offsets = [0, 20], sizes = [2, 1], strides = [1, 1]} : vector<2x48xf32> to vector<2x1xf32>
    %79 = vector.extract_strided_slice %58 {offsets = [0, 0], sizes = [2, 32], strides = [1, 1]} : vector<2x128xf32> to vector<2x32xf32>
    %80 = vector.broadcast %78 : vector<2x1xf32> to vector<2x32xf32>
    %81 = arith.mulf %80, %79 : vector<2x32xf32>
    %82 = vector.extract_strided_slice %0 {offsets = [0, 21], sizes = [2, 1], strides = [1, 1]} : vector<2x48xf32> to vector<2x1xf32>
    %83 = vector.extract_strided_slice %58 {offsets = [0, 32], sizes = [2, 32], strides = [1, 1]} : vector<2x128xf32> to vector<2x32xf32>
    %84 = vector.broadcast %82 : vector<2x1xf32> to vector<2x32xf32>
    %85 = arith.mulf %84, %83 : vector<2x32xf32>
    %86 = arith.addf %81, %85 : vector<2x32xf32>
    %87 = vector.extract_strided_slice %0 {offsets = [0, 22], sizes = [2, 1], strides = [1, 1]} : vector<2x48xf32> to vector<2x1xf32>
    %88 = vector.extract_strided_slice %58 {offsets = [0, 64], sizes = [2, 32], strides = [1, 1]} : vector<2x128xf32> to vector<2x32xf32>
    %89 = vector.broadcast %87 : vector<2x1xf32> to vector<2x32xf32>
    %90 = arith.mulf %89, %88 : vector<2x32xf32>
    %91 = arith.addf %86, %90 : vector<2x32xf32>
    %92 = vector.extract_strided_slice %0 {offsets = [0, 23], sizes = [2, 1], strides = [1, 1]} : vector<2x48xf32> to vector<2x1xf32>
    %93 = vector.extract_strided_slice %58 {offsets = [0, 96], sizes = [2, 32], strides = [1, 1]} : vector<2x128xf32> to vector<2x32xf32>
    %94 = vector.broadcast %92 : vector<2x1xf32> to vector<2x32xf32>
    %95 = arith.mulf %94, %93 : vector<2x32xf32>
    %96 = arith.addf %91, %95 : vector<2x32xf32>
    %97 = vector.extract_strided_slice %0 {offsets = [0, 32], sizes = [2, 1], strides = [1, 1]} : vector<2x48xf32> to vector<2x1xf32>
    %98 = vector.extract_strided_slice %58 {offsets = [0, 0], sizes = [2, 32], strides = [1, 1]} : vector<2x128xf32> to vector<2x32xf32>
    %99 = vector.broadcast %97 : vector<2x1xf32> to vector<2x32xf32>
    %100 = arith.mulf %99, %98 : vector<2x32xf32>
    %101 = vector.extract_strided_slice %0 {offsets = [0, 33], sizes = [2, 1], strides = [1, 1]} : vector<2x48xf32> to vector<2x1xf32>
    %102 = vector.extract_strided_slice %58 {offsets = [0, 32], sizes = [2, 32], strides = [1, 1]} : vector<2x128xf32> to vector<2x32xf32>
    %103 = vector.broadcast %101 : vector<2x1xf32> to vector<2x32xf32>
    %104 = arith.mulf %103, %102 : vector<2x32xf32>
    %105 = arith.addf %100, %104 : vector<2x32xf32>
    %106 = vector.extract_strided_slice %0 {offsets = [0, 34], sizes = [2, 1], strides = [1, 1]} : vector<2x48xf32> to vector<2x1xf32>
    %107 = vector.extract_strided_slice %58 {offsets = [0, 64], sizes = [2, 32], strides = [1, 1]} : vector<2x128xf32> to vector<2x32xf32>
    %108 = vector.broadcast %106 : vector<2x1xf32> to vector<2x32xf32>
    %109 = arith.mulf %108, %107 : vector<2x32xf32>
    %110 = arith.addf %105, %109 : vector<2x32xf32>
    %111 = vector.extract_strided_slice %0 {offsets = [0, 35], sizes = [2, 1], strides = [1, 1]} : vector<2x48xf32> to vector<2x1xf32>
    %112 = vector.extract_strided_slice %58 {offsets = [0, 96], sizes = [2, 32], strides = [1, 1]} : vector<2x128xf32> to vector<2x32xf32>
    %113 = vector.broadcast %111 : vector<2x1xf32> to vector<2x32xf32>
    %114 = arith.mulf %113, %112 : vector<2x32xf32>
    %115 = arith.addf %110, %114 : vector<2x32xf32>
    %116 = vector.extract_strided_slice %0 {offsets = [0, 44], sizes = [2, 1], strides = [1, 1]} : vector<2x48xf32> to vector<2x1xf32>
    %117 = vector.extract_strided_slice %58 {offsets = [0, 0], sizes = [2, 32], strides = [1, 1]} : vector<2x128xf32> to vector<2x32xf32>
    %118 = vector.broadcast %116 : vector<2x1xf32> to vector<2x32xf32>
    %119 = arith.mulf %118, %117 : vector<2x32xf32>
    %120 = vector.extract_strided_slice %0 {offsets = [0, 45], sizes = [2, 1], strides = [1, 1]} : vector<2x48xf32> to vector<2x1xf32>
    %121 = vector.extract_strided_slice %58 {offsets = [0, 32], sizes = [2, 32], strides = [1, 1]} : vector<2x128xf32> to vector<2x32xf32>
    %122 = vector.broadcast %120 : vector<2x1xf32> to vector<2x32xf32>
    %123 = arith.mulf %122, %121 : vector<2x32xf32>
    %124 = arith.addf %119, %123 : vector<2x32xf32>
    %125 = vector.extract_strided_slice %0 {offsets = [0, 46], sizes = [2, 1], strides = [1, 1]} : vector<2x48xf32> to vector<2x1xf32>
    %126 = vector.extract_strided_slice %58 {offsets = [0, 64], sizes = [2, 32], strides = [1, 1]} : vector<2x128xf32> to vector<2x32xf32>
    %127 = vector.broadcast %125 : vector<2x1xf32> to vector<2x32xf32>
    %128 = arith.mulf %127, %126 : vector<2x32xf32>
    %129 = arith.addf %124, %128 : vector<2x32xf32>
    %130 = vector.extract_strided_slice %0 {offsets = [0, 47], sizes = [2, 1], strides = [1, 1]} : vector<2x48xf32> to vector<2x1xf32>
    %131 = vector.extract_strided_slice %58 {offsets = [0, 96], sizes = [2, 32], strides = [1, 1]} : vector<2x128xf32> to vector<2x32xf32>
    %132 = vector.broadcast %130 : vector<2x1xf32> to vector<2x32xf32>
    %133 = arith.mulf %132, %131 : vector<2x32xf32>
    %134 = arith.addf %129, %133 : vector<2x32xf32>
    %135 = tpu.concatenate %77, %96, %115, %134 in 1 : vector<2x32xf32>, vector<2x32xf32>, vector<2x32xf32>, vector<2x32xf32> -> vector<2x128xf32>
    %c0_33 = arith.constant 0 : index
    %c0_34 = arith.constant 0 : index
    %136 = vector.load %arg8[%c0_33, %c0_34] : memref<128x20xf32, #tpu.memory_space<vmem>>, vector<128x20xf32>
    %cst_35 = arith.constant dense<0.000000e+00> : vector<2x20xf32>
    %137 = tpu.matmul %51, %136, %cst_35 {dimension_numbers = #tpu.dot_dimension_numbers<[1], [0], [0], [1], [0, 0, 1, 1], [], []>} : vector<2x128xf32>, vector<128x20xf32>, vector<2x20xf32> -> vector<2x20xf32>
    %c0_36 = arith.constant 0 : index
    %c0_37 = arith.constant 0 : index
    %138 = vector.load %arg9[%c0_36, %c0_37] : memref<128x20xf32, #tpu.memory_space<vmem>>, vector<128x20xf32>
    %cst_38 = arith.constant dense<0.000000e+00> : vector<2x20xf32>
    %139 = tpu.matmul %135, %138, %cst_38 {dimension_numbers = #tpu.dot_dimension_numbers<[1], [0], [0], [1], [0, 0, 1, 1], [], []>} : vector<2x128xf32>, vector<128x20xf32>, vector<2x20xf32> -> vector<2x20xf32>
    %140 = arith.addf %137, %139 : vector<2x20xf32>
    %c0_39 = arith.constant 0 : index
    %c0_40 = arith.constant 0 : index
    %141 = vector.load %arg15[%c0_39, %c0_40] : memref<1x20xf32, #tpu.memory_space<vmem>>, vector<1x20xf32>
    %142 = vector.broadcast %141 : vector<1x20xf32> to vector<2x20xf32>
    %143 = arith.addf %140, %142 : vector<2x20xf32>
    %c0_41 = arith.constant 0 : index
    %c0_42 = arith.constant 0 : index
    %144 = vector.load %arg16[%c0_41, %c0_42] : memref<2x20xf32, #tpu.memory_space<vmem>>, vector<2x20xf32>
    tpu.vector_store %arg16[%c0_41, %c0_42], %143 {strides = array<i32>} : memref<2x20xf32, #tpu.memory_space<vmem>>, vector<2x20xf32>,
    %c0_43 = arith.constant 0 : index
    %c0_44 = arith.constant 0 : index
    %145 = vector.load %arg17[%c0_43, %c0_44] : memref<2x128xf32, #tpu.memory_space<vmem>>, vector<2x128xf32>
    tpu.vector_store %arg17[%c0_43, %c0_44], %51 {strides = array<i32>} : memref<2x128xf32, #tpu.memory_space<vmem>>, vector<2x128xf32>,
    return
  }
  func.func @transform_0(%arg0: i32) -> (i32, i32) {
    %c0_i32 = arith.constant 0 : i32
    %c0_i32_0 = arith.constant 0 : i32
    return %arg0, %c0_i32 : i32, i32
  }
  func.func @transform_1(%arg0: i32) -> (i32, i32) {
    %c0_i32 = arith.constant 0 : i32
    %c0_i32_0 = arith.constant 0 : i32
    return %arg0, %c0_i32 : i32, i32
  }
  func.func @transform_2(%arg0: i32) -> (i32, i32) {
    %c0_i32 = arith.constant 0 : i32
    %c0_i32_0 = arith.constant 0 : i32
    %c0_i32_1 = arith.constant 0 : i32
    return %c0_i32, %c0_i32_0 : i32, i32
  }
  func.func @transform_3(%arg0: i32) -> (i32, i32) {
    %c0_i32 = arith.constant 0 : i32
    %c0_i32_0 = arith.constant 0 : i32
    %c0_i32_1 = arith.constant 0 : i32
    return %c0_i32, %c0_i32_0 : i32, i32
  }
  func.func @transform_4(%arg0: i32) -> (i32, i32) {
    %c0_i32 = arith.constant 0 : i32
    %c0_i32_0 = arith.constant 0 : i32
    %c0_i32_1 = arith.constant 0 : i32
    return %c0_i32, %c0_i32_0 : i32, i32
  }
  func.func @transform_5(%arg0: i32) -> (i32, i32) {
    %c0_i32 = arith.constant 0 : i32
    %c0_i32_0 = arith.constant 0 : i32
    %c0_i32_1 = arith.constant 0 : i32
    return %c0_i32, %c0_i32_0 : i32, i32
  }
  func.func @transform_6(%arg0: i32) -> (i32, i32) {
    %c0_i32 = arith.constant 0 : i32
    %c0_i32_0 = arith.constant 0 : i32
    %c0_i32_1 = arith.constant 0 : i32
    return %c0_i32, %c0_i32_0 : i32, i32
  }
  func.func @transform_7(%arg0: i32) -> (i32, i32) {
    %c0_i32 = arith.constant 0 : i32
    %c0_i32_0 = arith.constant 0 : i32
    %c0_i32_1 = arith.constant 0 : i32
    return %c0_i32, %c0_i32_0 : i32, i32
  }
  func.func @transform_8(%arg0: i32) -> (i32, i32) {
    %c0_i32 = arith.constant 0 : i32
    %c0_i32_0 = arith.constant 0 : i32
    %c0_i32_1 = arith.constant 0 : i32
    return %c0_i32, %c0_i32_0 : i32, i32
  }
  func.func @transform_9(%arg0: i32) -> (i32, i32) {
    %c0_i32 = arith.constant 0 : i32
    %c0_i32_0 = arith.constant 0 : i32
    %c0_i32_1 = arith.constant 0 : i32
    return %c0_i32, %c0_i32_0 : i32, i32
  }
  func.func @transform_10(%arg0: i32) -> (i32, i32) {
    %c0_i32 = arith.constant 0 : i32
    %c0_i32_0 = arith.constant 0 : i32
    %c0_i32_1 = arith.constant 0 : i32
    return %c0_i32, %c0_i32_0 : i32, i32
  }
  func.func @transform_11(%arg0: i32) -> (i32, i32) {
    %c0_i32 = arith.constant 0 : i32
    %c0_i32_0 = arith.constant 0 : i32
    %c0_i32_1 = arith.constant 0 : i32
    return %c0_i32, %c0_i32_0 : i32, i32
  }
  func.func @transform_12(%arg0: i32) -> (i32, i32) {
    %c0_i32 = arith.constant 0 : i32
    %c0_i32_0 = arith.constant 0 : i32
    %c0_i32_1 = arith.constant 0 : i32
    return %c0_i32, %c0_i32_0 : i32, i32
  }
  func.func @transform_13(%arg0: i32) -> (i32, i32) {
    %c0_i32 = arith.constant 0 : i32
    %c0_i32_0 = arith.constant 0 : i32
    %c0_i32_1 = arith.constant 0 : i32
    return %c0_i32, %c0_i32_0 : i32, i32
  }
  func.func @transform_14(%arg0: i32) -> (i32, i32) {
    %c0_i32 = arith.constant 0 : i32
    %c0_i32_0 = arith.constant 0 : i32
    %c0_i32_1 = arith.constant 0 : i32
    return %c0_i32, %c0_i32_0 : i32, i32
  }
  func.func @transform_15(%arg0: i32) -> (i32, i32) {
    %c0_i32 = arith.constant 0 : i32
    %c0_i32_0 = arith.constant 0 : i32
    return %arg0, %c0_i32 : i32, i32
  }
  func.func @transform_16(%arg0: i32) -> (i32, i32) {
    %c0_i32 = arith.constant 0 : i32
    %c0_i32_0 = arith.constant 0 : i32
    return %arg0, %c0_i32 : i32, i32
  }
}

</mosaic_0001>

<llo_original>
// kernel: fc4_forward.1
$region0: #{fc4_forward.1}
  #allocation0 [shape = 'u32[]', space=smem, size = 0x4, offset = 0x4, fixed_abs, tag = 'smem constant byte address 0x4 - core index']
  #allocation1 [shape = 'u32[72,128]{1,0:T(1,128)}', space=vmem, size = 0x9000, scoped, tag = 'internal scratch']
  %s0 = inlined_call_operand.vmem [shape: f32[2,48], index: 0, kind: input, shape index: {}]
  %s1 = inlined_call_operand.vmem [shape: f32[2,128], index: 1, kind: input, shape index: {}]
  %s2 = inlined_call_operand.vmem [shape: f32[48,64], index: 2, kind: input, shape index: {}]
  %s3 = inlined_call_operand.hbm [shape: f32[48,128], index: 3, kind: input, shape index: {}]
  %s4 = inlined_call_operand.vmem [shape: f32[64,384], index: 4, kind: input, shape index: {}]
  %s5 = inlined_call_operand.hbm [shape: f32[128,384], index: 5, kind: input, shape index: {}]
  %s6 = inlined_call_operand.hbm [shape: f32[128,128], index: 6, kind: input, shape index: {}]
  %s7 = inlined_call_operand.vmem [shape: f32[128,20], index: 7, kind: input, shape index: {}]
  %s8 = inlined_call_operand.vmem [shape: f32[128,20], index: 8, kind: input, shape index: {}]
  %s9 = inlined_call_operand.vmem [shape: f32[1,64], index: 9, kind: input, shape index: {}]
  %s10 = inlined_call_operand.vmem [shape: f32[1,128], index: 10, kind: input, shape index: {}]
  %s11 = inlined_call_operand.vmem [shape: f32[1,384], index: 11, kind: input, shape index: {}]
  %s12 = inlined_call_operand.vmem [shape: f32[1,384], index: 12, kind: input, shape index: {}]
  %s13 = inlined_call_operand.vmem [shape: f32[1,128], index: 13, kind: input, shape index: {}]
  %s14 = inlined_call_operand.vmem [shape: f32[1,20], index: 14, kind: input, shape index: {}]
  %s15 = inlined_call_operand.vmem [shape: f32[2,20], index: 15, kind: output, shape index: {0}]
  %s16 = inlined_call_operand.vmem [shape: f32[2,128], index: 16, kind: output, shape index: {1}]
  %17 = xla_tuple %s15, %s16
  %s18 = sld [smem:[#allocation0]]
  $region90: #{fc4_forward.1} parent=0
    _
  %s20 = ssub.s32 1, %s18
  %s21 = scalar_select 0, %s20, %s18
  $region1: #{fc4_forward.1} parent=0
    #allocation2 [shape = 'u8[24576]{0}', space=vmem, size = 0x6000, scoped, tag = 'input window, operand 3, single buffered']
    #allocation3 [shape = 's32[1]{0}', space=sflag, size = 0x4, scoped, tag = 'scoped memory for fc4_forward.1']
    #allocation4 [shape = 'u8[196608]{0}', space=vmem, size = 0x30000, scoped, tag = 'input window, operand 5, single buffered']
    #allocation5 [shape = 's32[1]{0}', space=sflag, size = 0x4, scoped, tag = 'scoped memory for fc4_forward.1']
    #allocation6 [shape = 'u8[65536]{0}', space=vmem, size = 0x10000, scoped, tag = 'input window, operand 6, single buffered']
    %22 = vsyncpa [#allocation3], 0
    %23 = vsyncpa [#allocation5], 0
    // Predicated region
    $region2: #{fc4_forward.1} parent=1 // pred_check
      _
    $region3: #{fc4_forward.1} parent=1 // pred_check_branch
      %25 = sbr.rel (0) target = $region5
    $region4: #{fc4_forward.1} parent=1 // pred_region
      _
    $region5: #{fc4_forward.1} parent=1 // pred_fallthru
      _
    // Predicated region
    $region6: #{fc4_forward.1} parent=1 // pred_check
      _
    $region7: #{fc4_forward.1} parent=1 // pred_check_branch
      %27 = sbr.rel (0) target = $region9
    $region8: #{fc4_forward.1} parent=1 // pred_region
      _
    $region9: #{fc4_forward.1} parent=1 // pred_fallthru
      _
    // Predicated region
    $region10: #{fc4_forward.1} parent=1 // pred_check
      _
    $region11: #{fc4_forward.1} parent=1 // pred_check_branch
      %29 = sbr.rel (0) target = $region13
    $region12: #{fc4_forward.1} parent=1 // pred_region
      _
    $region13: #{fc4_forward.1} parent=1 // pred_fallthru
      _
    // Predicated region
    $region14: #{fc4_forward.1} parent=1 // pred_check
      _
    $region15: #{fc4_forward.1} parent=1 // pred_check_branch
      %31 = sbr.rel (0) target = $region17
    $region16: #{fc4_forward.1} parent=1 // pred_region
      %33 = vsyncadd [#allocation3], 0
      %s34 = sshll.u32 %s3, 4
      %s35 = int_to_ptr.hbm [resolvable:$true] %s34
      %s36 = sshll.u32 [#allocation2], 4
      %s37 = int_to_ptr.vmem [resolvable:$true] %s36
      %42 = dma.hbm_to_vmem [thread:$0]  %s35, 768, %s37, [#allocation3], 128, 128, 8
    $region17: #{fc4_forward.1} parent=1 // pred_fallthru
      _
    // Predicated region
    $region18: #{fc4_forward.1} parent=1 // pred_check
      _
    $region19: #{fc4_forward.1} parent=1 // pred_check_branch
      %44 = sbr.rel (0) target = $region21
    $region20: #{fc4_forward.1} parent=1 // pred_region
      _
    $region21: #{fc4_forward.1} parent=1 // pred_fallthru
      _
    // Predicated region
    $region22: #{fc4_forward.1} parent=1 // pred_check
      _
    $region23: #{fc4_forward.1} parent=1 // pred_check_branch
      %46 = sbr.rel (0) target = $region25
    $region24: #{fc4_forward.1} parent=1 // pred_region
      %48 = vsyncadd [#allocation5], 0
      %s49 = sshll.u32 %s5, 4
      %s50 = int_to_ptr.hbm [resolvable:$true] %s49
      %s51 = sshll.u32 [#allocation4], 4
      %s52 = int_to_ptr.vmem [resolvable:$true] %s51
      %57 = dma.hbm_to_vmem [thread:$0]  %s50, 6144, %s52, [#allocation5], 384, 384, 24
    $region25: #{fc4_forward.1} parent=1 // pred_fallthru
      _
    // Predicated region
    $region26: #{fc4_forward.1} parent=1 // pred_check
      _
    $region27: #{fc4_forward.1} parent=1 // pred_check_branch
      %59 = sbr.rel (0) target = $region29
    $region28: #{fc4_forward.1} parent=1 // pred_region
      %61 = vsyncadd [#allocation5], 0
      %s62 = sshll.u32 %s6, 4
      %s63 = int_to_ptr.hbm [resolvable:$true] %s62
      %s64 = sshll.u32 [#allocation6], 4
      %s65 = int_to_ptr.vmem [resolvable:$true] %s64
      %70 = dma.hbm_to_vmem [thread:$0]  %s63, 2048, %s65, [#allocation5], 128, 128, 8
    $region29: #{fc4_forward.1} parent=1 // pred_fallthru
      _
    // Predicated region
    $region30: #{fc4_forward.1} parent=1 // pred_check
      _
    $region31: #{fc4_forward.1} parent=1 // pred_check_branch
      %72 = sbr.rel (0) target = $region33
    $region32: #{fc4_forward.1} parent=1 // pred_region
      _
    $region33: #{fc4_forward.1} parent=1 // pred_fallthru
      _
    // Predicated region
    $region34: #{fc4_forward.1} parent=1 // pred_check
      _
    $region35: #{fc4_forward.1} parent=1 // pred_check_branch
      %74 = sbr.rel (0) target = $region37
    $region36: #{fc4_forward.1} parent=1 // pred_region
      _
    $region37: #{fc4_forward.1} parent=1 // pred_fallthru
      _
    // Predicated region
    $region38: #{fc4_forward.1} parent=1 // pred_check
      _
    $region39: #{fc4_forward.1} parent=1 // pred_check_branch
      %76 = sbr.rel (0) target = $region41
    $region40: #{fc4_forward.1} parent=1 // pred_region
      _
    $region41: #{fc4_forward.1} parent=1 // pred_fallthru
      _
    // Predicated region
    $region42: #{fc4_forward.1} parent=1 // pred_check
      _
    $region43: #{fc4_forward.1} parent=1 // pred_check_branch
      %78 = sbr.rel (0) target = $region45
    $region44: #{fc4_forward.1} parent=1 // pred_region
      _
    $region45: #{fc4_forward.1} parent=1 // pred_fallthru
      _
    // Predicated region
    $region46: #{fc4_forward.1} parent=1 // pred_check
      _
    $region47: #{fc4_forward.1} parent=1 // pred_check_branch
      %80 = sbr.rel (0) target = $region49
    $region48: #{fc4_forward.1} parent=1 // pred_region
      _
    $region49: #{fc4_forward.1} parent=1 // pred_fallthru
      _
    // Predicated region
    $region50: #{fc4_forward.1} parent=1 // pred_check
      _
    $region51: #{fc4_forward.1} parent=1 // pred_check_branch
      %82 = sbr.rel (0) target = $region53
    $region52: #{fc4_forward.1} parent=1 // pred_region
      _
    $region53: #{fc4_forward.1} parent=1 // pred_fallthru
      _
    // Predicated region
    $region54: #{fc4_forward.1} parent=1 // pred_check
      _
    $region55: #{fc4_forward.1} parent=1 // pred_check_branch
      %84 = sbr.rel (0) target = $region57
    $region56: #{fc4_forward.1} parent=1 // pred_region
      _
    $region57: #{fc4_forward.1} parent=1 // pred_fallthru
      _
    // Predicated region
    $region58: #{fc4_forward.1} parent=1 // pred_check
      _
    $region59: #{fc4_forward.1} parent=1 // pred_check_branch
      %86 = sbr.rel (0) target = $region61
    $region60: #{fc4_forward.1} parent=1 // pred_region
      _
    $region61: #{fc4_forward.1} parent=1 // pred_fallthru
      _
    // Predicated region
    $region62: #{fc4_forward.1} parent=1 // pred_check
      _
    $region63: #{fc4_forward.1} parent=1 // pred_check_branch
      %88 = sbr.rel (0) target = $region65
    $region64: #{fc4_forward.1} parent=1 // pred_region
      %90 = dma.done [#allocation3], 768
    $region65: #{fc4_forward.1} parent=1 // pred_fallthru
      _
    // Predicated region
    $region66: #{fc4_forward.1} parent=1 // pred_check
      _
    $region67: #{fc4_forward.1} parent=1 // pred_check_branch
      %92 = sbr.rel (0) target = $region69
    $region68: #{fc4_forward.1} parent=1 // pred_region
      %94 = dma.done [#allocation5], 6144
    $region69: #{fc4_forward.1} parent=1 // pred_fallthru
      _
    // Predicated region
    $region70: #{fc4_forward.1} parent=1 // pred_check
      _
    $region71: #{fc4_forward.1} parent=1 // pred_check_branch
      %96 = sbr.rel (0) target = $region73
    $region72: #{fc4_forward.1} parent=1 // pred_region
      %98 = dma.done [#allocation5], 2048
    $region73: #{fc4_forward.1} parent=1 // pred_fallthru
      _
    %v99 = vld [vmem:[%s0] sm:$0x3]
    %v100 = vld [vmem:[%s1] sm:$0x3]
    %v101 = vld [vmem:[%s2] sm:$0xff]
    %v102 = vld [vmem:[%s2 + $0x8] sm:$0xff]
    %v103 = vld [vmem:[%s2 + $0x10] sm:$0xff]
    %v104 = vld [vmem:[%s2 + $0x18] sm:$0xff]
    %v105 = vld [vmem:[%s2 + $0x20] sm:$0xff]
    %v106 = vld [vmem:[%s2 + $0x28] sm:$0xff]
    %v107 = vld [vmem:[%s9] sm:$0x1]
    %v109 = vperm.slane %v107, 0
    %vm111 = vcmask 392192
    %v113 = vsel %vm111, %v99, 0
    %115 = vmatpush.msra.mxu0 0.0
    %116 = vmatpush.msra.mxu0 0.0
    %117 = vmatpush.msra.mxu0 0.0
    %118 = vmatpush.msra.mxu0 0.0
    %119 = vmatpush.msra.mxu0 0.0
    %120 = vmatpush.msra.mxu0 0.0
    %121 = vmatpush.msra.mxu0 0.0
    %122 = vmatpush.msra.mxu0 0.0
    %123 = vmatpush.msra.mxu0 0.0
    %124 = vmatpush.msra.mxu0 0.0
    %125 = vmatpush.msra.mxu0 %v106
    %126 = vmatpush.msra.mxu0 %v105
    %127 = vmatpush.msra.mxu0 %v104
    %128 = vmatpush.msra.mxu0 %v103
    %129 = vmatpush.msra.mxu0 %v102
    %130 = vmatpush.msra.mxu0 %v101
    %131 = vmatmul.f32.gmra.mxu0 %v113
    %v132 = vpop.f32.mrf.mxu0
    %v133 = vadd.f32 %v109, %v132
    %134 = vdwg.mxu0
    %v135 = vmax.f32 %v133, 0.0
    %v136 = vld [vmem:[#allocation2] sm:$0xff]
    %v137 = vld [vmem:[#allocation2 + $0x8] sm:$0xff]
    %v138 = vld [vmem:[#allocation2 + $0x10] sm:$0xff]
    %v139 = vld [vmem:[#allocation2 + $0x18] sm:$0xff]
    %v140 = vld [vmem:[#allocation2 + $0x20] sm:$0xff]
    %v141 = vld [vmem:[#allocation2 + $0x28] sm:$0xff]
    %v142 = vld [vmem:[%s10] sm:$0x1]
    %v144 = vperm.slane %v142, 0
    %146 = vmatpush.msra.mxu0 0.0
    %147 = vmatpush.msra.mxu0 0.0
    %148 = vmatpush.msra.mxu0 0.0
    %149 = vmatpush.msra.mxu0 0.0
    %150 = vmatpush.msra.mxu0 0.0
    %151 = vmatpush.msra.mxu0 0.0
    %152 = vmatpush.msra.mxu0 0.0
    %153 = vmatpush.msra.mxu0 0.0
    %154 = vmatpush.msra.mxu0 0.0
    %155 = vmatpush.msra.mxu0 0.0
    %156 = vmatpush.msra.mxu0 %v141
    %157 = vmatpush.msra.mxu0 %v140
    %158 = vmatpush.msra.mxu0 %v139
    %159 = vmatpush.msra.mxu0 %v138
    %160 = vmatpush.msra.mxu0 %v137
    %161 = vmatpush.msra.mxu0 %v136
    %162 = vmatmul.f32.gmra.mxu0 %v113
    %v163 = vpop.f32.mrf.mxu0
    %v164 = vadd.f32 %v144, %v163
    %165 = vdwg.mxu0
    %v166 = vmax.f32 %v164, 0.0
    %v167 = vld [vmem:[%s4] sm:$0xff]
    %v168 = vld [vmem:[%s4 + $0x8] sm:$0xff]
    %v169 = vld [vmem:[%s4 + $0x10] sm:$0xff]
    %v170 = vld [vmem:[%s4 + $0x18] sm:$0xff]
    %v171 = vld [vmem:[%s4 + $0x20] sm:$0xff]
    %v172 = vld [vmem:[%s4 + $0x28] sm:$0xff]
    %v173 = vld [vmem:[%s4 + $0x30] sm:$0xff]
    %v174 = vld [vmem:[%s4 + $0x38] sm:$0xff]
    %v175 = vld [vmem:[%s4 + $0x40] sm:$0xff]
    %v176 = vld [vmem:[%s4 + $0x48] sm:$0xff]
    %v177 = vld [vmem:[%s4 + $0x50] sm:$0xff]
    %v178 = vld [vmem:[%s4 + $0x58] sm:$0xff]
    %v179 = vld [vmem:[%s4 + $0x60] sm:$0xff]
    %v180 = vld [vmem:[%s4 + $0x68] sm:$0xff]
    %v181 = vld [vmem:[%s4 + $0x70] sm:$0xff]
    %v182 = vld [vmem:[%s4 + $0x78] sm:$0xff]
    %v183 = vld [vmem:[%s4 + $0x80] sm:$0xff]
    %v184 = vld [vmem:[%s4 + $0x88] sm:$0xff]
    %v185 = vld [vmem:[%s4 + $0x90] sm:$0xff]
    %v186 = vld [vmem:[%s4 + $0x98] sm:$0xff]
    %v187 = vld [vmem:[%s4 + $0xa0] sm:$0xff]
    %v188 = vld [vmem:[%s4 + $0xa8] sm:$0xff]
    %v189 = vld [vmem:[%s4 + $0xb0] sm:$0xff]
    %v190 = vld [vmem:[%s4 + $0xb8] sm:$0xff]
    %v191 = vld [vmem:[%s11] sm:$0x7]
    %v193 = vperm.slane %v191, 0
    %v194 = vperm.slane %v191, 1
    %v195 = vperm.slane %v191, 2
    %vm199 = vcmask 523264
    %v201 = vsel %vm199, %v135, 0
    %203 = vmatpush.msra.mxu0 0.0
    %204 = vmatpush.msra.mxu0 0.0
    %205 = vmatpush.msra.mxu0 0.0
    %206 = vmatpush.msra.mxu0 0.0
    %207 = vmatpush.msra.mxu0 0.0
    %208 = vmatpush.msra.mxu0 0.0
    %209 = vmatpush.msra.mxu0 0.0
    %210 = vmatpush.msra.mxu0 0.0
    %211 = vmatpush.msra.mxu0 %v188
    %212 = vmatpush.msra.mxu0 %v185
    %213 = vmatpush.msra.mxu0 %v182
    %214 = vmatpush.msra.mxu0 %v179
    %215 = vmatpush.msra.mxu0 %v176
    %216 = vmatpush.msra.mxu0 %v173
    %217 = vmatpush.msra.mxu0 %v170
    %218 = vmatpush.msra.mxu0 %v167
    %219 = vmatmul.f32.gmra.mxu0 %v201
    %v220 = vpop.f32.mrf.mxu0
    %v221 = vadd.f32 %v193, %v220
    %222 = vdwg.mxu0
    %223 = vmatpush.msra.mxu0 0.0
    %224 = vmatpush.msra.mxu0 0.0
    %225 = vmatpush.msra.mxu0 0.0
    %226 = vmatpush.msra.mxu0 0.0
    %227 = vmatpush.msra.mxu0 0.0
    %228 = vmatpush.msra.mxu0 0.0
    %229 = vmatpush.msra.mxu0 0.0
    %230 = vmatpush.msra.mxu0 0.0
    %231 = vmatpush.msra.mxu0 %v189
    %232 = vmatpush.msra.mxu0 %v186
    %233 = vmatpush.msra.mxu0 %v183
    %234 = vmatpush.msra.mxu0 %v180
    %235 = vmatpush.msra.mxu0 %v177
    %236 = vmatpush.msra.mxu0 %v174
    %237 = vmatpush.msra.mxu0 %v171
    %238 = vmatpush.msra.mxu0 %v168
    %239 = vmatmul.f32.gmra.mxu0 %v201
    %v240 = vpop.f32.mrf.mxu0
    %v241 = vadd.f32 %v194, %v240
    %242 = vdwg.mxu0
    %243 = vmatpush.msra.mxu0 0.0
    %244 = vmatpush.msra.mxu0 0.0
    %245 = vmatpush.msra.mxu0 0.0
    %246 = vmatpush.msra.mxu0 0.0
    %247 = vmatpush.msra.mxu0 0.0
    %248 = vmatpush.msra.mxu0 0.0
    %249 = vmatpush.msra.mxu0 0.0
    %250 = vmatpush.msra.mxu0 0.0
    %251 = vmatpush.msra.mxu0 %v190
    %252 = vmatpush.msra.mxu0 %v187
    %253 = vmatpush.msra.mxu0 %v184
    %254 = vmatpush.msra.mxu0 %v181
    %255 = vmatpush.msra.mxu0 %v178
    %256 = vmatpush.msra.mxu0 %v175
    %257 = vmatpush.msra.mxu0 %v172
    %258 = vmatpush.msra.mxu0 %v169
    %259 = vmatmul.f32.gmra.mxu0 %v201
    %v260 = vpop.f32.mrf.mxu0
    %v261 = vadd.f32 %v195, %v260
    %262 = vdwg.mxu0
    %v263 = vld [vmem:[#allocation4] sm:$0xff]
    %v264 = vld [vmem:[#allocation4 + $0x8] sm:$0xff]
    %v265 = vld [vmem:[#allocation4 + $0x10] sm:$0xff]
    %v266 = vld [vmem:[#allocation4 + $0x18] sm:$0xff]
    %v267 = vld [vmem:[#allocation4 + $0x20] sm:$0xff]
    %v268 = vld [vmem:[#allocation4 + $0x28] sm:$0xff]
    %v269 = vld [vmem:[#allocation4 + $0x30] sm:$0xff]
    %v270 = vld [vmem:[#allocation4 + $0x38] sm:$0xff]
    %v271 = vld [vmem:[#allocation4 + $0x40] sm:$0xff]
    %v272 = vld [vmem:[#allocation4 + $0x48] sm:$0xff]
    %v273 = vld [vmem:[#allocation4 + $0x50] sm:$0xff]
    %v274 = vld [vmem:[#allocation4 + $0x58] sm:$0xff]
    %v275 = vld [vmem:[#allocation4 + $0x60] sm:$0xff]
    %v276 = vld [vmem:[#allocation4 + $0x68] sm:$0xff]
    %v277 = vld [vmem:[#allocation4 + $0x70] sm:$0xff]
    %v278 = vld [vmem:[#allocation4 + $0x78] sm:$0xff]
    %v279 = vld [vmem:[#allocation4 + $0x80] sm:$0xff]
    %v280 = vld [vmem:[#allocation4 + $0x88] sm:$0xff]
    %v281 = vld [vmem:[#allocation4 + $0x90] sm:$0xff]
    %v282 = vld [vmem:[#allocation4 + $0x98] sm:$0xff]
    %v283 = vld [vmem:[#allocation4 + $0xa0] sm:$0xff]
    %v284 = vld [vmem:[#allocation4 + $0xa8] sm:$0xff]
    %v285 = vld [vmem:[#allocation4 + $0xb0] sm:$0xff]
    %v286 = vld [vmem:[#allocation4 + $0xb8] sm:$0xff]
    %v287 = vld [vmem:[#allocation4 + $0xc0] sm:$0xff]
    %v288 = vld [vmem:[#allocation4 + $0xc8] sm:$0xff]
    %v289 = vld [vmem:[#allocation4 + $0xd0] sm:$0xff]
    %v290 = vld [vmem:[#allocation4 + $0xd8] sm:$0xff]
    %v291 = vld [vmem:[#allocation4 + $0xe0] sm:$0xff]
    %v292 = vld [vmem:[#allocation4 + $0xe8] sm:$0xff]
    %v293 = vld [vmem:[#allocation4 + $0xf0] sm:$0xff]
    %v294 = vld [vmem:[#allocation4 + $0xf8] sm:$0xff]
    %v295 = vld [vmem:[#allocation4 + $0x100] sm:$0xff]
    %v296 = vld [vmem:[#allocation4 + $0x108] sm:$0xff]
    %v297 = vld [vmem:[#allocation4 + $0x110] sm:$0xff]
    %v298 = vld [vmem:[#allocation4 + $0x118] sm:$0xff]
    %v299 = vld [vmem:[#allocation4 + $0x120] sm:$0xff]
    %v300 = vld [vmem:[#allocation4 + $0x128] sm:$0xff]
    %v301 = vld [vmem:[#allocation4 + $0x130] sm:$0xff]
    %v302 = vld [vmem:[#allocation4 + $0x138] sm:$0xff]
    %v303 = vld [vmem:[#allocation4 + $0x140] sm:$0xff]
    %v304 = vld [vmem:[#allocation4 + $0x148] sm:$0xff]
    %v305 = vld [vmem:[#allocation4 + $0x150] sm:$0xff]
    %v306 = vld [vmem:[#allocation4 + $0x158] sm:$0xff]
    %v307 = vld [vmem:[#allocation4 + $0x160] sm:$0xff]
    %v308 = vld [vmem:[#allocation4 + $0x168] sm:$0xff]
    %v309 = vld [vmem:[#allocation4 + $0x170] sm:$0xff]
    %v310 = vld [vmem:[#allocation4 + $0x178] sm:$0xff]
    %v311 = vld [vmem:[%s12] sm:$0x7]
    %v313 = vperm.slane %v311, 0
    %v314 = vperm.slane %v311, 1
    %v315 = vperm.slane %v311, 2
    %319 = vmatpush.msra.mxu0 %v308
    %320 = vmatpush.msra.mxu0 %v305
    %321 = vmatpush.msra.mxu0 %v302
    %322 = vmatpush.msra.mxu0 %v299
    %323 = vmatpush.msra.mxu0 %v296
    %324 = vmatpush.msra.mxu0 %v293
    %325 = vmatpush.msra.mxu0 %v290
    %326 = vmatpush.msra.mxu0 %v287
    %327 = vmatpush.msra.mxu0 %v284
    %328 = vmatpush.msra.mxu0 %v281
    %329 = vmatpush.msra.mxu0 %v278
    %330 = vmatpush.msra.mxu0 %v275
    %331 = vmatpush.msra.mxu0 %v272
    %332 = vmatpush.msra.mxu0 %v269
    %333 = vmatpush.msra.mxu0 %v266
    %334 = vmatpush.msra.mxu0 %v263
    %335 = vmatmul.f32.gmra.mxu0 %v100
    %v336 = vpop.f32.mrf.mxu0
    %v337 = vadd.f32 %v313, %v336
    %338 = vdwg.mxu0
    %339 = vmatpush.msra.mxu0 %v309
    %340 = vmatpush.msra.mxu0 %v306
    %341 = vmatpush.msra.mxu0 %v303
    %342 = vmatpush.msra.mxu0 %v300
    %343 = vmatpush.msra.mxu0 %v297
    %344 = vmatpush.msra.mxu0 %v294
    %345 = vmatpush.msra.mxu0 %v291
    %346 = vmatpush.msra.mxu0 %v288
    %347 = vmatpush.msra.mxu0 %v285
    %348 = vmatpush.msra.mxu0 %v282
    %349 = vmatpush.msra.mxu0 %v279
    %350 = vmatpush.msra.mxu0 %v276
    %351 = vmatpush.msra.mxu0 %v273
    %352 = vmatpush.msra.mxu0 %v270
    %353 = vmatpush.msra.mxu0 %v267
    %354 = vmatpush.msra.mxu0 %v264
    %355 = vmatmul.f32.gmra.mxu0 %v100
    %v356 = vpop.f32.mrf.mxu0
    %v357 = vadd.f32 %v314, %v356
    %358 = vdwg.mxu0
    %359 = vmatpush.msra.mxu0 %v310
    %360 = vmatpush.msra.mxu0 %v307
    %361 = vmatpush.msra.mxu0 %v304
    %362 = vmatpush.msra.mxu0 %v301
    %363 = vmatpush.msra.mxu0 %v298
    %364 = vmatpush.msra.mxu0 %v295
    %365 = vmatpush.msra.mxu0 %v292
    %366 = vmatpush.msra.mxu0 %v289
    %367 = vmatpush.msra.mxu0 %v286
    %368 = vmatpush.msra.mxu0 %v283
    %369 = vmatpush.msra.mxu0 %v280
    %370 = vmatpush.msra.mxu0 %v277
    %371 = vmatpush.msra.mxu0 %v274
    %372 = vmatpush.msra.mxu0 %v271
    %373 = vmatpush.msra.mxu0 %v268
    %374 = vmatpush.msra.mxu0 %v265
    %375 = vmatmul.f32.gmra.mxu0 %v100
    %v376 = vpop.f32.mrf.mxu0
    %v377 = vadd.f32 %v315, %v376
    %378 = vdwg.mxu0
    %v379 = vadd.f32 %v221, %v337
    %v380 = vxor.u32 %v379, 2147483648
    %v381 = vmul.f32 %v380, 1.442695
    %v382 = vpow.pop %v381
    %v383 = vadd.f32 %v382, 1.0
    %v384 = vrcp.pop %v383
    %v385 = vmul.f32 %v383, %v384
    %v386 = vsub.f32 1.0, %v385
    %v387 = vmul.f32 %v384, %v386
    %v388 = vadd.f32 %v384, %v387
    %vm389 = vweird.f32 %v383
    %vm390 = vweird.f32 %v384
    %vm391 = vmor %vm389, %vm390
    %v392 = vsel %vm391, %v384, %v388
    %v393 = vand.u32 2147483647, %v383
    %vm394 = vcmp.eq.f32.partialorder %v393, 8.507059e+37
    %v395 = vand.u32 %v383, 2147483648
    %v396 = vor.u32 1.1754944e-38, %v395
    %v397 = vsel %vm394, %v396, %v392
    %v398 = vmul.f32 1.0, %v397
    %v399 = vadd.f32 %v241, %v357
    %v400 = vxor.u32 %v399, 2147483648
    %v401 = vmul.f32 %v400, 1.442695
    %v402 = vpow.pop %v401
    %v403 = vadd.f32 %v402, 1.0
    %v404 = vrcp.pop %v403
    %v405 = vmul.f32 %v403, %v404
    %v406 = vsub.f32 1.0, %v405
    %v407 = vmul.f32 %v404, %v406
    %v408 = vadd.f32 %v404, %v407
    %vm409 = vweird.f32 %v403
    %vm410 = vweird.f32 %v404
    %vm411 = vmor %vm409, %vm410
    %v412 = vsel %vm411, %v404, %v408
    %v413 = vand.u32 2147483647, %v403
    %vm414 = vcmp.eq.f32.partialorder %v413, 8.507059e+37
    %v415 = vand.u32 %v403, 2147483648
    %v416 = vor.u32 1.1754944e-38, %v415
    %v417 = vsel %vm414, %v416, %v412
    %v418 = vmul.f32 1.0, %v417
    %v419 = vmul.f32 %v398, %v377
    %v420 = vadd.f32 %v261, %v419
    %v421 = vtanh.pop %v420
    %v422 = vsub.f32 1.0, %v418
    %v423 = vmul.f32 %v422, %v421
    %v424 = vmul.f32 %v418, %v100
    %v425 = vadd.f32 %v423, %v424
    %v426 = vld [vmem:[#allocation6] sm:$0xff]
    %v427 = vld [vmem:[#allocation6 + $0x8] sm:$0xff]
    %v428 = vld [vmem:[#allocation6 + $0x10] sm:$0xff]
    %v429 = vld [vmem:[#allocation6 + $0x18] sm:$0xff]
    %v430 = vld [vmem:[#allocation6 + $0x20] sm:$0xff]
    %v431 = vld [vmem:[#allocation6 + $0x28] sm:$0xff]
    %v432 = vld [vmem:[#allocation6 + $0x30] sm:$0xff]
    %v433 = vld [vmem:[#allocation6 + $0x38] sm:$0xff]
    %v434 = vld [vmem:[#allocation6 + $0x40] sm:$0xff]
    %v435 = vld [vmem:[#allocation6 + $0x48] sm:$0xff]
    %v436 = vld [vmem:[#allocation6 + $0x50] sm:$0xff]
    %v437 = vld [vmem:[#allocation6 + $0x58] sm:$0xff]
    %v438 = vld [vmem:[#allocation6 + $0x60] sm:$0xff]
    %v439 = vld [vmem:[#allocation6 + $0x68] sm:$0xff]
    %v440 = vld [vmem:[#allocation6 + $0x70] sm:$0xff]
    %v441 = vld [vmem:[#allocation6 + $0x78] sm:$0xff]
    %v442 = vld [vmem:[%s13] sm:$0x1]
    %v444 = vperm.slane %v442, 0
    %446 = vmatpush.msra.mxu0 %v441
    %447 = vmatpush.msra.mxu0 %v440
    %448 = vmatpush.msra.mxu0 %v439
    %449 = vmatpush.msra.mxu0 %v438
    %450 = vmatpush.msra.mxu0 %v437
    %451 = vmatpush.msra.mxu0 %v436
    %452 = vmatpush.msra.mxu0 %v435
    %453 = vmatpush.msra.mxu0 %v434
    %454 = vmatpush.msra.mxu0 %v433
    %455 = vmatpush.msra.mxu0 %v432
    %456 = vmatpush.msra.mxu0 %v431
    %457 = vmatpush.msra.mxu0 %v430
    %458 = vmatpush.msra.mxu0 %v429
    %459 = vmatpush.msra.mxu0 %v428
    %460 = vmatpush.msra.mxu0 %v427
    %461 = vmatpush.msra.mxu0 %v426
    %462 = vmatmul.f32.gmra.mxu0 %v166
    %v463 = vpop.f32.mrf.mxu0
    %v464 = vadd.f32 %v444, %v463
    %465 = vdwg.mxu0
    %v466 = vmax.f32 %v464, 0.0
    %467 = vset.pattern.permute.xlu0 8
    %468 = vperm.xlu0 %467, %v99
    %v469 = vpop.permute.xlu0 %468
    %v471 = vmul.f32 %v469, %v466
    %472 = vset.pattern.permute.xlu0 9
    %473 = vperm.xlu0 %472, %v99
    %v474 = vpop.permute.xlu0 %473
    %v476 = vmul.f32 %v474, %v466
    %478 = vrot.lane.b32.xlu0 %v476, 96
    %v479 = vpop.permute.xlu0 %478
    %v481 = vadd.f32 %v471, %v479
    %482 = vset.pattern.permute.xlu0 10
    %483 = vperm.xlu0 %482, %v99
    %v484 = vpop.permute.xlu0 %483
    %v486 = vmul.f32 %v484, %v466
    %488 = vrot.lane.b32.xlu0 %v486, 64
    %v489 = vpop.permute.xlu0 %488
    %v491 = vadd.f32 %v481, %v489
    %492 = vset.pattern.permute.xlu0 11
    %493 = vperm.xlu0 %492, %v99
    %v494 = vpop.permute.xlu0 %493
    %v496 = vmul.f32 %v494, %v466
    %498 = vrot.lane.b32.xlu0 %v496, 32
    %v499 = vpop.permute.xlu0 %498
    %v501 = vadd.f32 %v491, %v499
    %502 = vset.pattern.permute.xlu0 20
    %503 = vperm.xlu0 %502, %v99
    %v504 = vpop.permute.xlu0 %503
    %v506 = vmul.f32 %v504, %v466
    %507 = vset.pattern.permute.xlu0 21
    %508 = vperm.xlu0 %507, %v99
    %v509 = vpop.permute.xlu0 %508
    %v511 = vmul.f32 %v509, %v466
    %513 = vrot.lane.b32.xlu0 %v511, 96
    %v514 = vpop.permute.xlu0 %513
    %v516 = vadd.f32 %v506, %v514
    %517 = vset.pattern.permute.xlu0 22
    %518 = vperm.xlu0 %517, %v99
    %v519 = vpop.permute.xlu0 %518
    %v521 = vmul.f32 %v519, %v466
    %523 = vrot.lane.b32.xlu0 %v521, 64
    %v524 = vpop.permute.xlu0 %523
    %v526 = vadd.f32 %v516, %v524
    %527 = vset.pattern.permute.xlu0 23
    %528 = vperm.xlu0 %527, %v99
    %v529 = vpop.permute.xlu0 %528
    %v531 = vmul.f32 %v529, %v466
    %533 = vrot.lane.b32.xlu0 %v531, 32
    %v534 = vpop.permute.xlu0 %533
    %v536 = vadd.f32 %v526, %v534
    %537 = vset.pattern.permute.xlu0 32
    %538 = vperm.xlu0 %537, %v99
    %v539 = vpop.permute.xlu0 %538
    %v541 = vmul.f32 %v539, %v466
    %542 = vset.pattern.permute.xlu0 33
    %543 = vperm.xlu0 %542, %v99
    %v544 = vpop.permute.xlu0 %543
    %v546 = vmul.f32 %v544, %v466
    %548 = vrot.lane.b32.xlu0 %v546, 96
    %v549 = vpop.permute.xlu0 %548
    %v551 = vadd.f32 %v541, %v549
    %552 = vset.pattern.permute.xlu0 34
    %553 = vperm.xlu0 %552, %v99
    %v554 = vpop.permute.xlu0 %553
    %v556 = vmul.f32 %v554, %v466
    %558 = vrot.lane.b32.xlu0 %v556, 64
    %v559 = vpop.permute.xlu0 %558
    %v561 = vadd.f32 %v551, %v559
    %562 = vset.pattern.permute.xlu0 35
    %563 = vperm.xlu0 %562, %v99
    %v564 = vpop.permute.xlu0 %563
    %v566 = vmul.f32 %v564, %v466
    %568 = vrot.lane.b32.xlu0 %v566, 32
    %v569 = vpop.permute.xlu0 %568
    %v571 = vadd.f32 %v561, %v569
    %572 = vset.pattern.permute.xlu0 44
    %573 = vperm.xlu0 %572, %v99
    %v574 = vpop.permute.xlu0 %573
    %v576 = vmul.f32 %v574, %v466
    %577 = vset.pattern.permute.xlu0 45
    %578 = vperm.xlu0 %577, %v99
    %v579 = vpop.permute.xlu0 %578
    %v581 = vmul.f32 %v579, %v466
    %583 = vrot.lane.b32.xlu0 %v581, 96
    %v584 = vpop.permute.xlu0 %583
    %v586 = vadd.f32 %v576, %v584
    %587 = vset.pattern.permute.xlu0 46
    %588 = vperm.xlu0 %587, %v99
    %v589 = vpop.permute.xlu0 %588
    %v591 = vmul.f32 %v589, %v466
    %593 = vrot.lane.b32.xlu0 %v591, 64
    %v594 = vpop.permute.xlu0 %593
    %v596 = vadd.f32 %v586, %v594
    %597 = vset.pattern.permute.xlu0 47
    %598 = vperm.xlu0 %597, %v99
    %v599 = vpop.permute.xlu0 %598
    %v601 = vmul.f32 %v599, %v466
    %603 = vrot.lane.b32.xlu0 %v601, 32
    %v604 = vpop.permute.xlu0 %603
    %v606 = vadd.f32 %v596, %v604
    %608 = vrot.lane.b32.xlu0 %v536, 32
    %v609 = vpop.permute.xlu0 %608
    %612 = vrot.lane.b32.xlu0 %v571, 64
    %v613 = vpop.permute.xlu0 %612
    %616 = vrot.lane.b32.xlu0 %v606, 96
    %v617 = vpop.permute.xlu0 %616
    %vm619 = vcmask 261120
    %v620 = vsel %vm619, %v501, %v609
    %v621 = vsel %vm199, %v620, %v613
    %vm622 = vcmask 785408
    %v623 = vsel %vm622, %v621, %v617
    %v624 = vld [vmem:[%s7] sm:$0xff]
    %v625 = vld [vmem:[%s7 + $0x8] sm:$0xff]
    %v626 = vld [vmem:[%s7 + $0x10] sm:$0xff]
    %v627 = vld [vmem:[%s7 + $0x18] sm:$0xff]
    %v628 = vld [vmem:[%s7 + $0x20] sm:$0xff]
    %v629 = vld [vmem:[%s7 + $0x28] sm:$0xff]
    %v630 = vld [vmem:[%s7 + $0x30] sm:$0xff]
    %v631 = vld [vmem:[%s7 + $0x38] sm:$0xff]
    %v632 = vld [vmem:[%s7 + $0x40] sm:$0xff]
    %v633 = vld [vmem:[%s7 + $0x48] sm:$0xff]
    %v634 = vld [vmem:[%s7 + $0x50] sm:$0xff]
    %v635 = vld [vmem:[%s7 + $0x58] sm:$0xff]
    %v636 = vld [vmem:[%s7 + $0x60] sm:$0xff]
    %v637 = vld [vmem:[%s7 + $0x68] sm:$0xff]
    %v638 = vld [vmem:[%s7 + $0x70] sm:$0xff]
    %v639 = vld [vmem:[%s7 + $0x78] sm:$0xff]
    %v640 = vld [vmem:[%s8] sm:$0xff]
    %v641 = vld [vmem:[%s8 + $0x8] sm:$0xff]
    %v642 = vld [vmem:[%s8 + $0x10] sm:$0xff]
    %v643 = vld [vmem:[%s8 + $0x18] sm:$0xff]
    %v644 = vld [vmem:[%s8 + $0x20] sm:$0xff]
    %v645 = vld [vmem:[%s8 + $0x28] sm:$0xff]
    %v646 = vld [vmem:[%s8 + $0x30] sm:$0xff]
    %v647 = vld [vmem:[%s8 + $0x38] sm:$0xff]
    %v648 = vld [vmem:[%s8 + $0x40] sm:$0xff]
    %v649 = vld [vmem:[%s8 + $0x48] sm:$0xff]
    %v650 = vld [vmem:[%s8 + $0x50] sm:$0xff]
    %v651 = vld [vmem:[%s8 + $0x58] sm:$0xff]
    %v652 = vld [vmem:[%s8 + $0x60] sm:$0xff]
    %v653 = vld [vmem:[%s8 + $0x68] sm:$0xff]
    %v654 = vld [vmem:[%s8 + $0x70] sm:$0xff]
    %v655 = vld [vmem:[%s8 + $0x78] sm:$0xff]
    %656 = vmatpush.msra.mxu0 %v655
    %657 = vmatpush.msra.mxu0 %v654
    %658 = vmatpush.msra.mxu0 %v653
    %659 = vmatpush.msra.mxu0 %v652
    %660 = vmatpush.msra.mxu0 %v651
    %661 = vmatpush.msra.mxu0 %v650
    %662 = vmatpush.msra.mxu0 %v649
    %663 = vmatpush.msra.mxu0 %v648
    %664 = vmatpush.msra.mxu0 %v647
    %665 = vmatpush.msra.mxu0 %v646
    %666 = vmatpush.msra.mxu0 %v645
    %667 = vmatpush.msra.mxu0 %v644
    %668 = vmatpush.msra.mxu0 %v643
    %669 = vmatpush.msra.mxu0 %v642
    %670 = vmatpush.msra.mxu0 %v641
    %671 = vmatpush.msra.mxu0 %v640
    %672 = vmatmul.f32.gmra.mxu0 %v623
    %v673 = vpop.f32.mrf.mxu0
    %v674 = vadd.f32 0.0, %v673
    %675 = vdwg.mxu0
    %676 = vmatpush.msra.mxu0 %v639
    %677 = vmatpush.msra.mxu0 %v638
    %678 = vmatpush.msra.mxu0 %v637
    %679 = vmatpush.msra.mxu0 %v636
    %680 = vmatpush.msra.mxu0 %v635
    %681 = vmatpush.msra.mxu0 %v634
    %682 = vmatpush.msra.mxu0 %v633
    %683 = vmatpush.msra.mxu0 %v632
    %684 = vmatpush.msra.mxu0 %v631
    %685 = vmatpush.msra.mxu0 %v630
    %686 = vmatpush.msra.mxu0 %v629
    %687 = vmatpush.msra.mxu0 %v628
    %688 = vmatpush.msra.mxu0 %v627
    %689 = vmatpush.msra.mxu0 %v626
    %690 = vmatpush.msra.mxu0 %v625
    %691 = vmatpush.msra.mxu0 %v624
    %692 = vmatmul.f32.gmra.mxu0 %v425
    %v693 = vpop.f32.mrf.mxu0
    %v694 = vadd.f32 %v674, %v693
    %695 = vdwg.mxu0
    %v696 = vld [vmem:[%s14] sm:$0x1]
    %v698 = vperm.slane %v696, 0
    %v700 = vadd.f32 %v694, %v698
    %vm701 = vcmask 156672
    %702 = vst.msk [vmem:[%s15] sm:$0x3] %vm701, %v700
    %703 = vst [vmem:[%s16] sm:$0x3] %v425
    // Predicated region
    $region74: #{fc4_forward.1} parent=1 // pred_check
      _
    $region75: #{fc4_forward.1} parent=1 // pred_check_branch
      %705 = sbr.rel (0) target = $region77
    $region76: #{fc4_forward.1} parent=1 // pred_region
      _
    $region77: #{fc4_forward.1} parent=1 // pred_fallthru
      _
    // Predicated region
    $region78: #{fc4_forward.1} parent=1 // pred_check
      _
    $region79: #{fc4_forward.1} parent=1 // pred_check_branch
      %707 = sbr.rel (0) target = $region81
    $region80: #{fc4_forward.1} parent=1 // pred_region
      _
    $region81: #{fc4_forward.1} parent=1 // pred_fallthru
      _
    // Predicated region
    $region82: #{fc4_forward.1} parent=1 // pred_check
      _
    $region83: #{fc4_forward.1} parent=1 // pred_check_branch
      %709 = sbr.rel (0) target = $region85
    $region84: #{fc4_forward.1} parent=1 // pred_region
      _
    $region85: #{fc4_forward.1} parent=1 // pred_fallthru
      _
    // Predicated region
    $region86: #{fc4_forward.1} parent=1 // pred_check
      _
    $region87: #{fc4_forward.1} parent=1 // pred_check_branch
      %711 = sbr.rel (0) target = $region89
    $region88: #{fc4_forward.1} parent=1 // pred_region
      _
    $region89: #{fc4_forward.1} parent=1 // pred_fallthru
      _
    %712 = vsyncpa [#allocation3], 1
    %713 = vsyncpa [#allocation5], 1

</llo_original>
